<compile_context>
chip_gen: v6e
topology: v6e:2x2x1
jax: 0.10.0
libtpu: 0.0.40
codegen_flags: <defaults>
</compile_context>

<pallas_src>
import jax
import jax.numpy as jnp
from jax import lax
from jax.experimental import pallas as pl
from jax.experimental.pallas import tpu as pltpu


def _conv1x1_sigmoid_kernel(x_ref, w_ref, b_ref, o_ref):
    # x_ref: (M, Cin)   w_ref: (Cout, Cin)   b_ref: (1, Cout)   o_ref: (M, Cout)
    # Contract Cin of x with Cin of w -> (M, Cout); MXU consumes w directly,
    # no transpose materialized anywhere.
    acc = lax.dot_general(
        x_ref[...], w_ref[...],
        dimension_numbers=(((1,), (1,)), ((), ())),
        preferred_element_type=jnp.float32,
    )
    acc = acc + b_ref[...]
    o_ref[...] = jax.nn.sigmoid(acc).astype(o_ref.dtype)


def conv1x1_sigmoid(x_nchw, weight, bias):
    """x_nchw: (N, Cin, H, W); weight: (Cout, Cin, 1, 1); bias: (Cout,)."""
    N, Cin, H, W = x_nchw.shape
    Cout = weight.shape[0]
    M = N * H * W

    # Glue (reshape-only; no transposes when H = W = 1, which is this module's case).
    if H * W == 1:
        x2d = x_nchw.reshape(M, Cin)
    else:
        x2d = jnp.transpose(x_nchw, (0, 2, 3, 1)).reshape(M, Cin)
    w2d = weight.reshape(Cout, Cin)      # PyTorch layout kept; contraction done in-kernel
    b2d = bias.reshape(1, Cout)

    out2d = pl.pallas_call(
        _conv1x1_sigmoid_kernel,
        out_shape=jax.ShapeDtypeStruct((M, Cout), x_nchw.dtype),
        in_specs=[
            pl.BlockSpec(memory_space=pltpu.MemorySpace.VMEM),
            pl.BlockSpec(memory_space=pltpu.MemorySpace.VMEM),
            pl.BlockSpec(memory_space=pltpu.MemorySpace.VMEM),
        ],
        out_specs=pl.BlockSpec(memory_space=pltpu.MemorySpace.VMEM),
    )(x2d, w2d, b2d)

    # Back to NCHW.
    if H * W == 1:
        return out2d.reshape(N, Cout, H, W)
    return jnp.transpose(out2d.reshape(N, H, W, Cout), (0, 3, 1, 2))


# TODO(synk): if this is a squeeze-excite gate, fuse the preceding global-pool and
# the following channel-wise multiply into this kernel at the call site to amortize
# the launch/DMA latency that dominates this tiny op.


if __name__ == "__main__":
    key = jax.random.PRNGKey(0)
    kx, kw, kb = jax.random.split(key, 3)

    N, Cin, H, W = 1, 84, 1, 1
    Cout = 336

    # Deterministic synthetic parameters (matching Conv2d(84, 336, 1) shapes).
    x = jax.random.normal(kx, (N, Cin, H, W), dtype=jnp.float32)
    weight = jax.random.normal(kw, (Cout, Cin, 1, 1), dtype=jnp.float32) * 0.05
    bias = jax.random.normal(kb, (Cout,), dtype=jnp.float32) * 0.05

    out = conv1x1_sigmoid(x, weight, bias)
    jax.block_until_ready(out)

    # Reference check in plain JAX.
    ref = jax.nn.sigmoid(
        jnp.einsum("nchw,oc->nohw", x, weight.reshape(Cout, Cin))
        + bias.reshape(1, Cout, 1, 1)
    )
    assert out.shape == (N, Cout, H, W)
    assert jnp.allclose(out, ref, atol=1e-5, rtol=1e-5)

    print("KERNEL_OK")
</pallas_src>

<mosaic_0001>
module attributes {stable_mosaic.version = 11 : i64} {
  func.func @_conv1x1_sigmoid_kernel(%arg0: memref<1x84xf32, #tpu.memory_space<vmem>>, %arg1: memref<336x84xf32, #tpu.memory_space<vmem>>, %arg2: memref<1x336xf32, #tpu.memory_space<vmem>>, %arg3: memref<1x336xf32, #tpu.memory_space<vmem>>) attributes {dimension_semantics = [], scalar_prefetch = 0 : i64, scratch_operands = 0 : i64, tpu.core_type = #tpu.core_type<tc>} {
    %c0 = arith.constant 0 : index
    %c0_0 = arith.constant 0 : index
    %0 = vector.load %arg0[%c0, %c0_0] : memref<1x84xf32, #tpu.memory_space<vmem>>, vector<1x84xf32>
    %c0_1 = arith.constant 0 : index
    %c0_2 = arith.constant 0 : index
    %1 = vector.load %arg1[%c0_1, %c0_2] : memref<336x84xf32, #tpu.memory_space<vmem>>, vector<336x84xf32>
    %cst = arith.constant dense<0.000000e+00> : vector<1x336xf32>
    %2 = tpu.matmul %0, %1, %cst {dimension_numbers = #tpu.dot_dimension_numbers<[1], [1], [0], [0], [0, 0, 1, 0], [], []>} : vector<1x84xf32>, vector<336x84xf32>, vector<1x336xf32> -> vector<1x336xf32>
    %c0_3 = arith.constant 0 : index
    %c0_4 = arith.constant 0 : index
    %3 = vector.load %arg2[%c0_3, %c0_4] : memref<1x336xf32, #tpu.memory_space<vmem>>, vector<1x336xf32>
    %4 = arith.addf %2, %3 : vector<1x336xf32>
    %5 = arith.negf %4 : vector<1x336xf32>
    %6 = math.exp %5 : vector<1x336xf32>
    %cst_5 = arith.constant 1.000000e+00 : f32
    %7 = vector.broadcast %cst_5 : f32 to vector<1x336xf32>
    %8 = arith.addf %7, %6 : vector<1x336xf32>
    %9 = arith.divf %7, %8 : vector<1x336xf32>
    %c0_6 = arith.constant 0 : index
    %c0_7 = arith.constant 0 : index
    %10 = vector.load %arg3[%c0_6, %c0_7] : memref<1x336xf32, #tpu.memory_space<vmem>>, vector<1x336xf32>
    tpu.vector_store %arg3[%c0_6, %c0_7], %9 {strides = array<i32>} : memref<1x336xf32, #tpu.memory_space<vmem>>, vector<1x336xf32>,
    return
  }
}

</mosaic_0001>

<llo_original>
// kernel: tpu_custom_call.1
$region0: #{tpu_custom_call.1}
  #allocation0 [shape = 'u32[]', space=smem, size = 0x4, offset = 0x4, fixed_abs, tag = 'smem constant byte address 0x4 - core index']
  #allocation1 [shape = 'u32[144,128]{1,0:T(1,128)}', space=vmem, size = 0x12000, scoped, tag = 'internal scratch']
  %s0 = inlined_call_operand.vmem [shape: f32[1,84], index: 0, kind: input, shape index: {}]
  %s1 = inlined_call_operand.vmem [shape: f32[336,84], index: 1, kind: input, shape index: {}]
  %s2 = inlined_call_operand.vmem [shape: f32[1,336], index: 2, kind: input, shape index: {}]
  %s3 = inlined_call_operand.hbm [shape: f32[1,336], index: 3, kind: output, shape index: {}]
  %s4 = sld [smem:[#allocation0]]
  $region22: #{tpu_custom_call.1} parent=0
    _
  %s6 = ssub.s32 1, %s4
  %s7 = scalar_select 0, %s6, %s4
  $region1: #{tpu_custom_call.1} parent=0
    #allocation2 [shape = 'u8[1536]{0}', space=vmem, size = 0x800, scoped, tag = 'output window, operand 0, single buffered']
    #allocation3 [shape = 's32[1]{0}', space=sflag, size = 0x4, scoped, tag = 'scoped memory for tpu_custom_call.1']
    %8 = vsyncpa [#allocation3], 0
    // Predicated region
    $region2: #{tpu_custom_call.1} parent=1 // pred_check
      _
    $region3: #{tpu_custom_call.1} parent=1 // pred_check_branch
      %10 = sbr.rel (0) target = $region5
    $region4: #{tpu_custom_call.1} parent=1 // pred_region
      _
    $region5: #{tpu_custom_call.1} parent=1 // pred_fallthru
      _
    // Predicated region
    $region6: #{tpu_custom_call.1} parent=1 // pred_check
      _
    $region7: #{tpu_custom_call.1} parent=1 // pred_check_branch
      %12 = sbr.rel (0) target = $region9
    $region8: #{tpu_custom_call.1} parent=1 // pred_region
      _
    $region9: #{tpu_custom_call.1} parent=1 // pred_fallthru
      _
    // Predicated region
    $region10: #{tpu_custom_call.1} parent=1 // pred_check
      _
    $region11: #{tpu_custom_call.1} parent=1 // pred_check_branch
      %14 = sbr.rel (0) target = $region13
    $region12: #{tpu_custom_call.1} parent=1 // pred_region
      _
    $region13: #{tpu_custom_call.1} parent=1 // pred_fallthru
      _
    %v15 = vld [vmem:[%s0] sm:$0x1]
    %v16 = vld [vmem:[%s1] sm:$0xff]
    %v17 = vld [vmem:[%s1 + $0x8] sm:$0xff]
    %v18 = vld [vmem:[%s1 + $0x10] sm:$0xff]
    %v19 = vld [vmem:[%s1 + $0x18] sm:$0xff]
    %v20 = vld [vmem:[%s1 + $0x20] sm:$0xff]
    %v21 = vld [vmem:[%s1 + $0x28] sm:$0xff]
    %v22 = vld [vmem:[%s1 + $0x30] sm:$0xff]
    %v23 = vld [vmem:[%s1 + $0x38] sm:$0xff]
    %v24 = vld [vmem:[%s1 + $0x40] sm:$0xff]
    %v25 = vld [vmem:[%s1 + $0x48] sm:$0xff]
    %v26 = vld [vmem:[%s1 + $0x50] sm:$0xff]
    %v27 = vld [vmem:[%s1 + $0x58] sm:$0xff]
    %v28 = vld [vmem:[%s1 + $0x60] sm:$0xff]
    %v29 = vld [vmem:[%s1 + $0x68] sm:$0xff]
    %v30 = vld [vmem:[%s1 + $0x70] sm:$0xff]
    %v31 = vld [vmem:[%s1 + $0x78] sm:$0xff]
    %v32 = vld [vmem:[%s1 + $0x80] sm:$0xff]
    %v33 = vld [vmem:[%s1 + $0x88] sm:$0xff]
    %v34 = vld [vmem:[%s1 + $0x90] sm:$0xff]
    %v35 = vld [vmem:[%s1 + $0x98] sm:$0xff]
    %v36 = vld [vmem:[%s1 + $0xa0] sm:$0xff]
    %v37 = vld [vmem:[%s1 + $0xa8] sm:$0xff]
    %v38 = vld [vmem:[%s1 + $0xb0] sm:$0xff]
    %v39 = vld [vmem:[%s1 + $0xb8] sm:$0xff]
    %v40 = vld [vmem:[%s1 + $0xc0] sm:$0xff]
    %v41 = vld [vmem:[%s1 + $0xc8] sm:$0xff]
    %v42 = vld [vmem:[%s1 + $0xd0] sm:$0xff]
    %v43 = vld [vmem:[%s1 + $0xd8] sm:$0xff]
    %v44 = vld [vmem:[%s1 + $0xe0] sm:$0xff]
    %v45 = vld [vmem:[%s1 + $0xe8] sm:$0xff]
    %v46 = vld [vmem:[%s1 + $0xf0] sm:$0xff]
    %v47 = vld [vmem:[%s1 + $0xf8] sm:$0xff]
    %v48 = vld [vmem:[%s1 + $0x100] sm:$0xff]
    %v49 = vld [vmem:[%s1 + $0x108] sm:$0xff]
    %v50 = vld [vmem:[%s1 + $0x110] sm:$0xff]
    %v51 = vld [vmem:[%s1 + $0x118] sm:$0xff]
    %v52 = vld [vmem:[%s1 + $0x120] sm:$0xff]
    %v53 = vld [vmem:[%s1 + $0x128] sm:$0xff]
    %v54 = vld [vmem:[%s1 + $0x130] sm:$0xff]
    %v55 = vld [vmem:[%s1 + $0x138] sm:$0xff]
    %v56 = vld [vmem:[%s1 + $0x140] sm:$0xff]
    %v57 = vld [vmem:[%s1 + $0x148] sm:$0xff]
    %v58 = vld [vmem:[%s2] sm:$0x7]
    %v60 = vlaneseq
    %v61 = vshrl.u32 %v60, 7
    %v62 = vsub.s32 0, %v61
    %v63 = vrot.slane %v58, %v62
    %v64 = vlaneseq
    %v65 = vshrl.u32 %v64, 7
    %v66 = vsub.s32 1, %v65
    %v67 = vrot.slane %v58, %v66
    %v68 = vlaneseq
    %v69 = vshrl.u32 %v68, 7
    %v70 = vsub.s32 2, %v69
    %v71 = vrot.slane %v58, %v70
    %vm75 = vcmask 687104
    %v77 = vsel %vm75, %v15, 0
    %v80 = vsel %vm75, %v16, 0
    %v83 = vsel %vm75, %v17, 0
    %v86 = vsel %vm75, %v18, 0
    %v89 = vsel %vm75, %v19, 0
    %v92 = vsel %vm75, %v20, 0
    %v95 = vsel %vm75, %v21, 0
    %v98 = vsel %vm75, %v22, 0
    %v101 = vsel %vm75, %v23, 0
    %v104 = vsel %vm75, %v24, 0
    %v107 = vsel %vm75, %v25, 0
    %v110 = vsel %vm75, %v26, 0
    %v113 = vsel %vm75, %v27, 0
    %v116 = vsel %vm75, %v28, 0
    %v119 = vsel %vm75, %v29, 0
    %v122 = vsel %vm75, %v30, 0
    %v125 = vsel %vm75, %v31, 0
    %v128 = vsel %vm75, %v32, 0
    %v131 = vsel %vm75, %v33, 0
    %v134 = vsel %vm75, %v34, 0
    %v137 = vsel %vm75, %v35, 0
    %v140 = vsel %vm75, %v36, 0
    %v143 = vsel %vm75, %v37, 0
    %v146 = vsel %vm75, %v38, 0
    %v149 = vsel %vm75, %v39, 0
    %v152 = vsel %vm75, %v40, 0
    %v155 = vsel %vm75, %v41, 0
    %v158 = vsel %vm75, %v42, 0
    %v161 = vsel %vm75, %v43, 0
    %v164 = vsel %vm75, %v44, 0
    %v167 = vsel %vm75, %v45, 0
    %v170 = vsel %vm75, %v46, 0
    %v173 = vsel %vm75, %v47, 0
    %v176 = vsel %vm75, %v48, 0
    %v179 = vsel %vm75, %v49, 0
    %v182 = vsel %vm75, %v50, 0
    %v185 = vsel %vm75, %v51, 0
    %v188 = vsel %vm75, %v52, 0
    %v191 = vsel %vm75, %v53, 0
    %v194 = vsel %vm75, %v54, 0
    %v197 = vsel %vm75, %v55, 0
    %v200 = vsel %vm75, %v56, 0
    %v203 = vsel %vm75, %v57, 0
    %205 = vmatprep.subr.mxu0 0.0
    %206 = vmatpush1.xpose.msra.mxu0 %v125
    %207 = vmatprep.subr.mxu0 0.0
    %208 = vmatpush1.xpose.msra.mxu0 %v122
    %209 = vmatprep.subr.mxu0 0.0
    %210 = vmatpush1.xpose.msra.mxu0 %v119
    %211 = vmatprep.subr.mxu0 0.0
    %212 = vmatpush1.xpose.msra.mxu0 %v116
    %213 = vmatprep.subr.mxu0 0.0
    %214 = vmatpush1.xpose.msra.mxu0 %v113
    %215 = vmatprep.subr.mxu0 0.0
    %216 = vmatpush1.xpose.msra.mxu0 %v110
    %217 = vmatprep.subr.mxu0 0.0
    %218 = vmatpush1.xpose.msra.mxu0 %v107
    %219 = vmatprep.subr.mxu0 0.0
    %220 = vmatpush1.xpose.msra.mxu0 %v104
    %221 = vmatprep.subr.mxu0 0.0
    %222 = vmatpush1.xpose.msra.mxu0 %v101
    %223 = vmatprep.subr.mxu0 0.0
    %224 = vmatpush1.xpose.msra.mxu0 %v98
    %225 = vmatprep.subr.mxu0 0.0
    %226 = vmatpush1.xpose.msra.mxu0 %v95
    %227 = vmatprep.subr.mxu0 0.0
    %228 = vmatpush1.xpose.msra.mxu0 %v92
    %229 = vmatprep.subr.mxu0 0.0
    %230 = vmatpush1.xpose.msra.mxu0 %v89
    %231 = vmatprep.subr.mxu0 0.0
    %232 = vmatpush1.xpose.msra.mxu0 %v86
    %233 = vmatprep.subr.mxu0 0.0
    %234 = vmatpush1.xpose.msra.mxu0 %v83
    %235 = vmatprep.subr.mxu0 0.0
    %236 = vmatpush1.xpose.msra.mxu0 %v80
    %237 = vmatprep.subr.mxu0 0.0
    %238 = vmatpush2.xpose.msra.mxu0 %v173
    %239 = vmatprep.subr.mxu0 0.0
    %240 = vmatpush2.xpose.msra.mxu0 %v170
    %241 = vmatprep.subr.mxu0 0.0
    %242 = vmatpush2.xpose.msra.mxu0 %v167
    %243 = vmatprep.subr.mxu0 0.0
    %244 = vmatpush2.xpose.msra.mxu0 %v164
    %245 = vmatprep.subr.mxu0 0.0
    %246 = vmatpush2.xpose.msra.mxu0 %v161
    %247 = vmatprep.subr.mxu0 0.0
    %248 = vmatpush2.xpose.msra.mxu0 %v158
    %249 = vmatprep.subr.mxu0 0.0
    %250 = vmatpush2.xpose.msra.mxu0 %v155
    %251 = vmatprep.subr.mxu0 0.0
    %252 = vmatpush2.xpose.msra.mxu0 %v152
    %253 = vmatprep.subr.mxu0 0.0
    %254 = vmatpush2.xpose.msra.mxu0 %v149
    %255 = vmatprep.subr.mxu0 0.0
    %256 = vmatpush2.xpose.msra.mxu0 %v146
    %257 = vmatprep.subr.mxu0 0.0
    %258 = vmatpush2.xpose.msra.mxu0 %v143
    %259 = vmatprep.subr.mxu0 0.0
    %260 = vmatpush2.xpose.msra.mxu0 %v140
    %261 = vmatprep.subr.mxu0 0.0
    %262 = vmatpush2.xpose.msra.mxu0 %v137
    %263 = vmatprep.subr.mxu0 0.0
    %264 = vmatpush2.xpose.msra.mxu0 %v134
    %265 = vmatprep.subr.mxu0 0.0
    %266 = vmatpush2.xpose.msra.mxu0 %v131
    %267 = vmatprep.subr.mxu0 0.0
    %268 = vmatpush2.xpose.msra.mxu0 %v128
    %269 = vmatprep.mubr.f32.mxu0 0.0
    %270 = vmatmul.mubr.f32.gmra.mxu0 %v77
    %v271 = vpop.f32.mrf.mxu0
    %v272 = vadd.f32 %v63, %v271
    %v273 = vpop.f32.mrf.mxu0
    %v274 = vadd.f32 %v67, %v273
    %275 = vdwg.mxu0
    %276 = vmatprep.subr.mxu0 0.0
    %277 = vmatpush1.xpose.msra.mxu0 0.0
    %278 = vmatprep.subr.mxu0 0.0
    %279 = vmatpush1.xpose.msra.mxu0 0.0
    %280 = vmatprep.subr.mxu0 0.0
    %281 = vmatpush1.xpose.msra.mxu0 0.0
    %282 = vmatprep.subr.mxu0 0.0
    %283 = vmatpush1.xpose.msra.mxu0 0.0
    %284 = vmatprep.subr.mxu0 0.0
    %285 = vmatpush1.xpose.msra.mxu0 0.0
    %286 = vmatprep.subr.mxu0 0.0
    %287 = vmatpush1.xpose.msra.mxu0 0.0
    %288 = vmatprep.subr.mxu0 0.0
    %289 = vmatpush1.xpose.msra.mxu0 %v203
    %290 = vmatprep.subr.mxu0 0.0
    %291 = vmatpush1.xpose.msra.mxu0 %v200
    %292 = vmatprep.subr.mxu0 0.0
    %293 = vmatpush1.xpose.msra.mxu0 %v197
    %294 = vmatprep.subr.mxu0 0.0
    %295 = vmatpush1.xpose.msra.mxu0 %v194
    %296 = vmatprep.subr.mxu0 0.0
    %297 = vmatpush1.xpose.msra.mxu0 %v191
    %298 = vmatprep.subr.mxu0 0.0
    %299 = vmatpush1.xpose.msra.mxu0 %v188
    %300 = vmatprep.subr.mxu0 0.0
    %301 = vmatpush1.xpose.msra.mxu0 %v185
    %302 = vmatprep.subr.mxu0 0.0
    %303 = vmatpush1.xpose.msra.mxu0 %v182
    %304 = vmatprep.subr.mxu0 0.0
    %305 = vmatpush1.xpose.msra.mxu0 %v179
    %306 = vmatprep.subr.mxu0 0.0
    %307 = vmatpush1.xpose.msra.mxu0 %v176
    %308 = vmatprep.subr.mxu0 0.0
    %309 = vmatpush2.xpose.msra.mxu0 0.0
    %310 = vmatprep.subr.mxu0 0.0
    %311 = vmatpush2.xpose.msra.mxu0 0.0
    %312 = vmatprep.subr.mxu0 0.0
    %313 = vmatpush2.xpose.msra.mxu0 0.0
    %314 = vmatprep.subr.mxu0 0.0
    %315 = vmatpush2.xpose.msra.mxu0 0.0
    %316 = vmatprep.subr.mxu0 0.0
    %317 = vmatpush2.xpose.msra.mxu0 0.0
    %318 = vmatprep.subr.mxu0 0.0
    %319 = vmatpush2.xpose.msra.mxu0 0.0
    %320 = vmatprep.subr.mxu0 0.0
    %321 = vmatpush2.xpose.msra.mxu0 0.0
    %322 = vmatprep.subr.mxu0 0.0
    %323 = vmatpush2.xpose.msra.mxu0 0.0
    %324 = vmatprep.subr.mxu0 0.0
    %325 = vmatpush2.xpose.msra.mxu0 0.0
    %326 = vmatprep.subr.mxu0 0.0
    %327 = vmatpush2.xpose.msra.mxu0 0.0
    %328 = vmatprep.subr.mxu0 0.0
    %329 = vmatpush2.xpose.msra.mxu0 0.0
    %330 = vmatprep.subr.mxu0 0.0
    %331 = vmatpush2.xpose.msra.mxu0 0.0
    %332 = vmatprep.subr.mxu0 0.0
    %333 = vmatpush2.xpose.msra.mxu0 0.0
    %334 = vmatprep.subr.mxu0 0.0
    %335 = vmatpush2.xpose.msra.mxu0 0.0
    %336 = vmatprep.subr.mxu0 0.0
    %337 = vmatpush2.xpose.msra.mxu0 0.0
    %338 = vmatprep.subr.mxu0 0.0
    %339 = vmatpush2.xpose.msra.mxu0 0.0
    %340 = vmatprep.mubr.f32.mxu0 0.0
    %341 = vmatmul.mubr.f32.gmra.mxu0 %v77
    %v342 = vpop.f32.mrf.mxu0
    %v343 = vadd.f32 %v71, %v342
    %v344 = vpop.f32.mrf.mxu0
    %345 = vdwg.mxu0
    %v346 = vxor.u32 %v272, 2147483648
    %v347 = vxor.u32 %v274, 2147483648
    %v348 = vxor.u32 %v343, 2147483648
    %v349 = vmul.f32 %v346, 1.442695
    %v350 = vpow.pop %v349
    %v351 = vmul.f32 %v347, 1.442695
    %v352 = vpow.pop %v351
    %v353 = vmul.f32 %v348, 1.442695
    %v354 = vpow.pop %v353
    %v355 = vadd.f32 %v350, 1.0
    %v356 = vadd.f32 %v352, 1.0
    %v357 = vadd.f32 %v354, 1.0
    %v358 = vrcp.pop %v355
    %v359 = vmul.f32 1.0, %v358
    %v360 = vrcp.pop %v356
    %v361 = vmul.f32 1.0, %v360
    %v362 = vrcp.pop %v357
    %v363 = vmul.f32 1.0, %v362
    %v367 = vcombine.low %v359, %v361
    %v369 = vunpack.c.l.s4 1966171168
    %v370 = vunpack.c.0.s8 %v369
    %v371 = vlaneseq
    %v372 = vshrl.u32 %v371, 7
    %v373 = vsub.s32 %v370, %v372
    %v374 = vrot.slane %v367, %v373
    %v376 = vunpack.c.l.s4 1966171168
    %v377 = vunpack.c.0.s8 %v376
    %v378 = vlaneseq
    %v379 = vshrl.u32 %v378, 7
    %v380 = vsub.s32 %v377, %v379
    %v381 = vrot.slane %v363, %v380
    %v382 = vcombine.low %v374, %v381
    %v384 = vunpack.c.l.s4 1966171168
    %v385 = vunpack.c.0.s8 %v384
    %v386 = vlaneseq
    %v387 = vshrl.u32 %v386, 7
    %v388 = vsub.s32 %v385, %v387
    %v389 = vrot.slane %v382, %v388
    %v391 = vlaneseq
    %vm392 = vcmp.ge.s32.totalorder %v391, 0
    %vm393 = vcmp.lt.s32.totalorder %v391, 336
    %vm394 = vmand %vm392, %vm393
    %395 = vst.msk [vmem:[#allocation2] sm:$0x7] %vm394, %v389
    // Predicated region
    $region14: #{tpu_custom_call.1} parent=1 // pred_check
      _
    $region15: #{tpu_custom_call.1} parent=1 // pred_check_branch
      %397 = sbr.rel (0) target = $region17
    $region16: #{tpu_custom_call.1} parent=1 // pred_region
      %s399 = ssub.s32 48, 48
      %400 = vsyncadd [#allocation3], %s399
      %s402 = sshll.u32 [#allocation2], 4
      %s403 = int_to_ptr.vmem [resolvable:$true] %s402
      %405 = dma.vmem_to_hbm [thread:$0]  %s403, 48, %s3, [#allocation3]
    $region17: #{tpu_custom_call.1} parent=1 // pred_fallthru
      _
    // Predicated region
    $region18: #{tpu_custom_call.1} parent=1 // pred_check
      _
    $region19: #{tpu_custom_call.1} parent=1 // pred_check_branch
      %407 = sbr.rel (0) target = $region21
    $region20: #{tpu_custom_call.1} parent=1 // pred_region
      %408 = dma.done [#allocation3], 48
    $region21: #{tpu_custom_call.1} parent=1 // pred_fallthru
      _
    %409 = vsyncpa [#allocation3], 1

</llo_original>
